<compile_context>
chip_gen: v7x
topology: tpu7x:2x2x1
jax: 0.10.0
libtpu: 0.0.40
codegen_flags: <defaults>
</compile_context>

<pallas_src>
import functools

import jax
import jax.numpy as jnp
from jax.experimental import pallas as pl
from jax.experimental.pallas import tpu as pltpu


def _round_up(n, m):
    return ((n + m - 1) // m) * m


# Sublane rows of the packed bias operand.
_ROW_EB1, _ROW_EB2, _ROW_BMUSIG, _ROW_DFUSED, _ROW_DB2 = range(5)


def _vae_kernel(
    x_ref, eps_ref,
    ew1_ref, ew2_ref, ewmusig_ref,
    dwfused_ref, dw2_ref,
    bias_ref,
    out_ref,
    *, sf, inter, hidden, latent,
):
    f32 = jnp.float32
    x = x_ref[...].astype(f32)

    # Packed biases: one (8, max_out) tile; static sublane/lane slices are free.
    bp = bias_ref[...]
    eb1 = bp[_ROW_EB1, :inter]
    eb2 = bp[_ROW_EB2, :hidden]
    bmusig = bp[_ROW_BMUSIG, :2 * latent]
    dbf = bp[_ROW_DFUSED, :inter]
    db2 = bp[_ROW_DB2, :sf]

    # ---- Encoder ----
    h1 = jnp.maximum(
        jnp.dot(x, ew1_ref[...], preferred_element_type=f32) + eb1, 0.0)
    h2 = jnp.maximum(
        jnp.dot(h1, ew2_ref[...], preferred_element_type=f32) + eb2, 0.0)
    # Fused mu / log_var projection: one MXU pass, then split.
    musig = jnp.dot(h2, ewmusig_ref[...], preferred_element_type=f32) + bmusig
    mu = musig[:, :latent]
    log_var = musig[:, latent:]

    # ---- Reparameterize: z = mu + eps * exp(0.5 * log_var) ----
    z = mu + eps_ref[...].astype(f32) * jnp.exp(0.5 * log_var)

    # ---- Decoder (fc + linear1 fused: no activation between them) ----
    d1 = jnp.maximum(
        jnp.dot(z, dwfused_ref[...], preferred_element_type=f32) + dbf, 0.0)
    recon = jnp.tanh(
        jnp.dot(d1, dw2_ref[...], preferred_element_type=f32) + db2)

    # Single lane-dense output slab: [recon | mu | log_var | pad].
    parts = [recon, musig]
    pad_w = out_ref.shape[-1] - (sf + 2 * latent)
    if pad_w:
        parts.append(jnp.zeros((recon.shape[0], pad_w), f32))
    out_ref[...] = jnp.concatenate(parts, axis=-1).astype(out_ref.dtype)


def vae_forward(x, eps, params):
    """x: (B, seq, feat) f32; eps: (B, latent) f32.

    Returns (reconstructed_x (B, seq, feat), mu (B, latent), log_var (B, latent)).
    """
    B, seq, feat = x.shape
    sf = seq * feat
    latent = eps.shape[-1]
    inter = params["enc_w1"].shape[1]
    hidden = params["enc_w2"].shape[1]

    # Batch tile: multiple of 8 (f32 sublane); cap at 128 rows per MXU pass.
    TB = 128 if B > 128 else _round_up(B, 8)
    B_pad = _round_up(B, TB)

    x_flat = x.reshape(B, sf)
    if B_pad != B:
        pad = ((0, B_pad - B), (0, 0))
        x_flat = jnp.pad(x_flat, pad)
        eps_p = jnp.pad(eps, pad)
    else:
        eps_p = eps

    # Fuse mu / log_var projection weights and biases.
    w_musig = jnp.concatenate([params["enc_wmu"], params["enc_wsig"]], axis=1)
    b_musig = jnp.concatenate(
        [params["enc_bmu"].reshape(-1), params["enc_bsig"].reshape(-1)])

    # Algebraic fusion of decoder fc + linear1 (mathematically identical):
    #   relu(linear1(fc(z))) = relu(z @ (Wfc @ W1) + (bfc @ W1 + b1))
    w_dec_fused = params["dec_fc_w"] @ params["dec_w1"]          # (latent, inter)
    b_dec_fused = (params["dec_fc_b"].reshape(-1) @ params["dec_w1"]
                   + params["dec_b1"].reshape(-1))

    # Pack all bias vectors into a single (8, max_out) operand.
    max_out = max(inter, hidden, 2 * latent, sf)

    def _row(b):
        b = b.reshape(-1).astype(jnp.float32)
        return jnp.pad(b, (0, max_out - b.shape[0]))

    bias_pack = jnp.stack(
        [
            _row(params["enc_b1"]),    # _ROW_EB1
            _row(params["enc_b2"]),    # _ROW_EB2
            _row(b_musig),             # _ROW_BMUSIG
            _row(b_dec_fused),         # _ROW_DFUSED
            _row(params["dec_b2"]),    # _ROW_DB2
            jnp.zeros((max_out,), jnp.float32),
            jnp.zeros((max_out,), jnp.float32),
            jnp.zeros((max_out,), jnp.float32),
        ],
        axis=0,
    )

    out_w = sf + 2 * latent
    out_w_pad = _round_up(out_w, 128)   # lane-dense unmasked stores

    operands = (
        x_flat, eps_p,
        params["enc_w1"], params["enc_w2"], w_musig,
        w_dec_fused, params["dec_w2"],
        bias_pack,
    )

    def resident(arr):
        # Weights/biases: one block covering the whole array, same block for
        # every batch tile -> stays resident in VMEM across the grid.
        return pl.BlockSpec(arr.shape, lambda i: (0, 0))

    kernel = functools.partial(
        _vae_kernel, sf=sf, inter=inter, hidden=hidden, latent=latent)

    flops = 2 * B_pad * (sf * inter + inter * hidden + hidden * 2 * latent
                         + latent * inter + inter * sf)
    transcendentals = B_pad * (latent + sf)          # exp + tanh
    bytes_accessed = (sum(int(o.size) * 4 for o in operands)
                      + B_pad * out_w_pad * 4)

    out = pl.pallas_call(
        kernel,
        out_shape=jax.ShapeDtypeStruct((B_pad, out_w_pad), jnp.float32),
        grid=(B_pad // TB,),
        in_specs=[
            pl.BlockSpec((TB, sf), lambda i: (i, 0)),       # x tile
            pl.BlockSpec((TB, latent), lambda i: (i, 0)),   # eps tile
            resident(params["enc_w1"]),
            resident(params["enc_w2"]),
            resident(w_musig),
            resident(w_dec_fused),
            resident(params["dec_w2"]),
            resident(bias_pack),
        ],
        out_specs=pl.BlockSpec((TB, out_w_pad), lambda i: (i, 0)),
        compiler_params=pltpu.CompilerParams(
            dimension_semantics=("parallel",)),
        cost_estimate=pl.CostEstimate(
            flops=flops,
            transcendentals=transcendentals,
            bytes_accessed=bytes_accessed),
    )(*operands)

    recon = out[:B, :sf].reshape(B, seq, feat)
    mu = out[:B, sf:sf + latent]
    log_var = out[:B, sf + latent:sf + 2 * latent]
    return recon, mu, log_var


def _linear_params(key, fan_in, fan_out):
    """PyTorch nn.Linear default init: U(-1/sqrt(fan_in), 1/sqrt(fan_in)).

    Weight stored transposed as (fan_in, fan_out); bias as (1, fan_out).
    """
    kw, kb = jax.random.split(key)
    bound = 1.0 / jnp.sqrt(jnp.float32(fan_in))
    w = jax.random.uniform(kw, (fan_in, fan_out), jnp.float32, -bound, bound)
    b = jax.random.uniform(kb, (1, fan_out), jnp.float32, -bound, bound)
    return w, b


def make_params(key, sequence_length, hidden_size, feature_size, latent_size):
    inter = hidden_size * 2
    sf = sequence_length * feature_size
    keys = jax.random.split(key, 7)
    p = {}
    # Encoder
    p["enc_w1"], p["enc_b1"] = _linear_params(keys[0], sf, inter)
    p["enc_w2"], p["enc_b2"] = _linear_params(keys[1], inter, hidden_size)
    p["enc_wmu"], p["enc_bmu"] = _linear_params(keys[2], hidden_size, latent_size)
    p["enc_wsig"], p["enc_bsig"] = _linear_params(keys[3], hidden_size, latent_size)
    # Decoder
    p["dec_fc_w"], p["dec_fc_b"] = _linear_params(keys[4], latent_size, hidden_size)
    p["dec_w1"], p["dec_b1"] = _linear_params(keys[5], hidden_size, inter)
    p["dec_w2"], p["dec_b2"] = _linear_params(keys[6], inter, sf)
    return p


def _reference_forward(x, eps, params):
    """Pure-JAX reference (matches the PyTorch module exactly, un-fused)."""
    B, seq, feat = x.shape
    xf = x.reshape(B, seq * feat)
    h1 = jnp.maximum(xf @ params["enc_w1"] + params["enc_b1"], 0.0)
    h2 = jnp.maximum(h1 @ params["enc_w2"] + params["enc_b2"], 0.0)
    mu = h2 @ params["enc_wmu"] + params["enc_bmu"]
    log_var = h2 @ params["enc_wsig"] + params["enc_bsig"]
    z = mu + eps * jnp.exp(0.5 * log_var)
    d0 = z @ params["dec_fc_w"] + params["dec_fc_b"]      # no ReLU, matches spec
    d1 = jnp.maximum(d0 @ params["dec_w1"] + params["dec_b1"], 0.0)
    d2 = jnp.tanh(d1 @ params["dec_w2"] + params["dec_b2"])
    return d2.reshape(B, seq, feat), mu, log_var


if __name__ == "__main__":
    batch = 2
    sequence_length = 8
    feature_size = 4
    hidden_size = 32
    latent_size = 16

    root = jax.random.PRNGKey(0)
    k_params, k_x, k_eps = jax.random.split(root, 3)

    params = make_params(k_params, sequence_length, hidden_size,
                         feature_size, latent_size)
    x = jax.random.normal(k_x, (batch, sequence_length, feature_size),
                          dtype=jnp.float32)
    # torch.randn_like inside reparameterize is drawn OUTSIDE the kernel so the
    # forward pass is deterministic / reproducible.
    eps = jax.random.normal(k_eps, (batch, latent_size), dtype=jnp.float32)

    recon, mu, log_var = jax.jit(vae_forward)(x, eps, params)
    jax.block_until_ready((recon, mu, log_var))

    # Sanity check against the pure-JAX reference.
    r_ref, mu_ref, lv_ref = _reference_forward(x, eps, params)
    assert recon.shape == (batch, sequence_length, feature_size)
    assert mu.shape == (batch, latent_size)
    assert log_var.shape == (batch, latent_size)
    assert jnp.allclose(recon, r_ref, atol=1e-5, rtol=1e-5)
    assert jnp.allclose(mu, mu_ref, atol=1e-5, rtol=1e-5)
    assert jnp.allclose(log_var, lv_ref, atol=1e-5, rtol=1e-5)

    print("KERNEL_OK")
</pallas_src>

<mosaic_0001>
module attributes {stable_mosaic.version = 11 : i64} {
  func.func @_vae_kernel(%arg0: i32, %arg1: memref<8x32xf32, #tpu.memory_space<vmem>>, %arg2: memref<8x16xf32, #tpu.memory_space<vmem>>, %arg3: memref<32x64xf32, #tpu.memory_space<vmem>>, %arg4: memref<64x32xf32, #tpu.memory_space<vmem>>, %arg5: memref<32x32xf32, #tpu.memory_space<vmem>>, %arg6: memref<16x64xf32, #tpu.memory_space<vmem>>, %arg7: memref<64x32xf32, #tpu.memory_space<vmem>>, %arg8: memref<8x64xf32, #tpu.memory_space<vmem>>, %arg9: memref<8x128xf32, #tpu.memory_space<vmem>>) attributes {dimension_semantics = [#tpu.dimension_semantics<parallel>], iteration_bounds = array<i64: 1>, scalar_prefetch = 0 : i64, scratch_operands = 0 : i64, tpu.core_type = #tpu.core_type<tc>, window_params = [{transform_indices = @transform_0, window_bounds = array<i64: 8, 32>}, {transform_indices = @transform_1, window_bounds = array<i64: 8, 16>}, {pipeline_mode = #tpu.pipeline_mode<synchronous>, transform_indices = @transform_2, window_bounds = array<i64: 32, 64>}, {pipeline_mode = #tpu.pipeline_mode<synchronous>, transform_indices = @transform_3, window_bounds = array<i64: 64, 32>}, {pipeline_mode = #tpu.pipeline_mode<synchronous>, transform_indices = @transform_4, window_bounds = array<i64: 32, 32>}, {pipeline_mode = #tpu.pipeline_mode<synchronous>, transform_indices = @transform_5, window_bounds = array<i64: 16, 64>}, {pipeline_mode = #tpu.pipeline_mode<synchronous>, transform_indices = @transform_6, window_bounds = array<i64: 64, 32>}, {pipeline_mode = #tpu.pipeline_mode<synchronous>, transform_indices = @transform_7, window_bounds = array<i64: 8, 64>}, {transform_indices = @transform_8, window_bounds = array<i64: 8, 128>}]} {
    %c0 = arith.constant 0 : index
    %c0_0 = arith.constant 0 : index
    %0 = vector.load %arg1[%c0, %c0_0] : memref<8x32xf32, #tpu.memory_space<vmem>>, vector<8x32xf32>
    %c0_1 = arith.constant 0 : index
    %c0_2 = arith.constant 0 : index
    %1 = vector.load %arg8[%c0_1, %c0_2] : memref<8x64xf32, #tpu.memory_space<vmem>>, vector<8x64xf32>
    %2 = vector.extract_strided_slice %1 {offsets = [0, 0], sizes = [1, 64], strides = [1, 1]} : vector<8x64xf32> to vector<1x64xf32>
    %3 = vector.shape_cast %2 : vector<1x64xf32> to vector<64xf32>
    %4 = vector.extract_strided_slice %1 {offsets = [1, 0], sizes = [1, 32], strides = [1, 1]} : vector<8x64xf32> to vector<1x32xf32>
    %5 = vector.shape_cast %4 : vector<1x32xf32> to vector<32xf32>
    %6 = vector.extract_strided_slice %1 {offsets = [2, 0], sizes = [1, 32], strides = [1, 1]} : vector<8x64xf32> to vector<1x32xf32>
    %7 = vector.shape_cast %6 : vector<1x32xf32> to vector<32xf32>
    %8 = vector.extract_strided_slice %1 {offsets = [3, 0], sizes = [1, 64], strides = [1, 1]} : vector<8x64xf32> to vector<1x64xf32>
    %9 = vector.shape_cast %8 : vector<1x64xf32> to vector<64xf32>
    %10 = vector.extract_strided_slice %1 {offsets = [4, 0], sizes = [1, 32], strides = [1, 1]} : vector<8x64xf32> to vector<1x32xf32>
    %11 = vector.shape_cast %10 : vector<1x32xf32> to vector<32xf32>
    %c0_3 = arith.constant 0 : index
    %c0_4 = arith.constant 0 : index
    %12 = vector.load %arg3[%c0_3, %c0_4] : memref<32x64xf32, #tpu.memory_space<vmem>>, vector<32x64xf32>
    %cst = arith.constant dense<0.000000e+00> : vector<8x64xf32>
    %13 = tpu.matmul %0, %12, %cst {dimension_numbers = #tpu.dot_dimension_numbers<[1], [0], [0], [1], [0, 0, 1, 1], [], []>} : vector<8x32xf32>, vector<32x64xf32>, vector<8x64xf32> -> vector<8x64xf32>
    %14 = vector.shape_cast %3 : vector<64xf32> to vector<1x64xf32>
    %15 = vector.broadcast %14 : vector<1x64xf32> to vector<8x64xf32>
    %16 = arith.addf %13, %15 : vector<8x64xf32>
    %cst_5 = arith.constant 0.000000e+00 : f32
    %17 = vector.broadcast %cst_5 : f32 to vector<8x64xf32>
    %18 = arith.maximumf %16, %17 : vector<8x64xf32>
    %c0_6 = arith.constant 0 : index
    %c0_7 = arith.constant 0 : index
    %19 = vector.load %arg4[%c0_6, %c0_7] : memref<64x32xf32, #tpu.memory_space<vmem>>, vector<64x32xf32>
    %cst_8 = arith.constant dense<0.000000e+00> : vector<8x32xf32>
    %20 = tpu.matmul %18, %19, %cst_8 {dimension_numbers = #tpu.dot_dimension_numbers<[1], [0], [0], [1], [0, 0, 1, 1], [], []>} : vector<8x64xf32>, vector<64x32xf32>, vector<8x32xf32> -> vector<8x32xf32>
    %21 = vector.shape_cast %5 : vector<32xf32> to vector<1x32xf32>
    %22 = vector.broadcast %21 : vector<1x32xf32> to vector<8x32xf32>
    %23 = arith.addf %20, %22 : vector<8x32xf32>
    %cst_9 = arith.constant 0.000000e+00 : f32
    %24 = vector.broadcast %cst_9 : f32 to vector<8x32xf32>
    %25 = arith.maximumf %23, %24 : vector<8x32xf32>
    %c0_10 = arith.constant 0 : index
    %c0_11 = arith.constant 0 : index
    %26 = vector.load %arg5[%c0_10, %c0_11] : memref<32x32xf32, #tpu.memory_space<vmem>>, vector<32x32xf32>
    %cst_12 = arith.constant dense<0.000000e+00> : vector<8x32xf32>
    %27 = tpu.matmul %25, %26, %cst_12 {dimension_numbers = #tpu.dot_dimension_numbers<[1], [0], [0], [1], [0, 0, 1, 1], [], []>} : vector<8x32xf32>, vector<32x32xf32>, vector<8x32xf32> -> vector<8x32xf32>
    %28 = vector.shape_cast %7 : vector<32xf32> to vector<1x32xf32>
    %29 = vector.broadcast %28 : vector<1x32xf32> to vector<8x32xf32>
    %30 = arith.addf %27, %29 : vector<8x32xf32>
    %31 = vector.extract_strided_slice %30 {offsets = [0, 0], sizes = [8, 16], strides = [1, 1]} : vector<8x32xf32> to vector<8x16xf32>
    %32 = vector.extract_strided_slice %30 {offsets = [0, 16], sizes = [8, 16], strides = [1, 1]} : vector<8x32xf32> to vector<8x16xf32>
    %c0_13 = arith.constant 0 : index
    %c0_14 = arith.constant 0 : index
    %33 = vector.load %arg2[%c0_13, %c0_14] : memref<8x16xf32, #tpu.memory_space<vmem>>, vector<8x16xf32>
    %cst_15 = arith.constant 5.000000e-01 : f32
    %34 = vector.broadcast %cst_15 : f32 to vector<8x16xf32>
    %35 = arith.mulf %34, %32 : vector<8x16xf32>
    %36 = math.exp %35 : vector<8x16xf32>
    %37 = arith.mulf %33, %36 : vector<8x16xf32>
    %38 = arith.addf %31, %37 : vector<8x16xf32>
    %c0_16 = arith.constant 0 : index
    %c0_17 = arith.constant 0 : index
    %39 = vector.load %arg6[%c0_16, %c0_17] : memref<16x64xf32, #tpu.memory_space<vmem>>, vector<16x64xf32>
    %cst_18 = arith.constant dense<0.000000e+00> : vector<8x64xf32>
    %40 = tpu.matmul %38, %39, %cst_18 {dimension_numbers = #tpu.dot_dimension_numbers<[1], [0], [0], [1], [0, 0, 1, 1], [], []>} : vector<8x16xf32>, vector<16x64xf32>, vector<8x64xf32> -> vector<8x64xf32>
    %41 = vector.shape_cast %9 : vector<64xf32> to vector<1x64xf32>
    %42 = vector.broadcast %41 : vector<1x64xf32> to vector<8x64xf32>
    %43 = arith.addf %40, %42 : vector<8x64xf32>
    %cst_19 = arith.constant 0.000000e+00 : f32
    %44 = vector.broadcast %cst_19 : f32 to vector<8x64xf32>
    %45 = arith.maximumf %43, %44 : vector<8x64xf32>
    %c0_20 = arith.constant 0 : index
    %c0_21 = arith.constant 0 : index
    %46 = vector.load %arg7[%c0_20, %c0_21] : memref<64x32xf32, #tpu.memory_space<vmem>>, vector<64x32xf32>
    %cst_22 = arith.constant dense<0.000000e+00> : vector<8x32xf32>
    %47 = tpu.matmul %45, %46, %cst_22 {dimension_numbers = #tpu.dot_dimension_numbers<[1], [0], [0], [1], [0, 0, 1, 1], [], []>} : vector<8x64xf32>, vector<64x32xf32>, vector<8x32xf32> -> vector<8x32xf32>
    %48 = vector.shape_cast %11 : vector<32xf32> to vector<1x32xf32>
    %49 = vector.broadcast %48 : vector<1x32xf32> to vector<8x32xf32>
    %50 = arith.addf %47, %49 : vector<8x32xf32>
    %51 = math.tanh %50 : vector<8x32xf32>
    %cst_23 = arith.constant 0.000000e+00 : f32
    %52 = vector.broadcast %cst_23 : f32 to vector<8x64xf32>
    %53 = tpu.concatenate %51, %30, %52 in 1 : vector<8x32xf32>, vector<8x32xf32>, vector<8x64xf32> -> vector<8x128xf32>
    %c0_24 = arith.constant 0 : index
    %c0_25 = arith.constant 0 : index
    %54 = vector.load %arg9[%c0_24, %c0_25] : memref<8x128xf32, #tpu.memory_space<vmem>>, vector<8x128xf32>
    tpu.vector_store %arg9[%c0_24, %c0_25], %53 {strides = array<i32>} : memref<8x128xf32, #tpu.memory_space<vmem>>, vector<8x128xf32>,
    return
  }
  func.func @transform_0(%arg0: i32) -> (i32, i32) {
    %c0_i32 = arith.constant 0 : i32
    %c0_i32_0 = arith.constant 0 : i32
    return %arg0, %c0_i32 : i32, i32
  }
  func.func @transform_1(%arg0: i32) -> (i32, i32) {
    %c0_i32 = arith.constant 0 : i32
    %c0_i32_0 = arith.constant 0 : i32
    return %arg0, %c0_i32 : i32, i32
  }
  func.func @transform_2(%arg0: i32) -> (i32, i32) {
    %c0_i32 = arith.constant 0 : i32
    %c0_i32_0 = arith.constant 0 : i32
    %c0_i32_1 = arith.constant 0 : i32
    return %c0_i32, %c0_i32_0 : i32, i32
  }
  func.func @transform_3(%arg0: i32) -> (i32, i32) {
    %c0_i32 = arith.constant 0 : i32
    %c0_i32_0 = arith.constant 0 : i32
    %c0_i32_1 = arith.constant 0 : i32
    return %c0_i32, %c0_i32_0 : i32, i32
  }
  func.func @transform_4(%arg0: i32) -> (i32, i32) {
    %c0_i32 = arith.constant 0 : i32
    %c0_i32_0 = arith.constant 0 : i32
    %c0_i32_1 = arith.constant 0 : i32
    return %c0_i32, %c0_i32_0 : i32, i32
  }
  func.func @transform_5(%arg0: i32) -> (i32, i32) {
    %c0_i32 = arith.constant 0 : i32
    %c0_i32_0 = arith.constant 0 : i32
    %c0_i32_1 = arith.constant 0 : i32
    return %c0_i32, %c0_i32_0 : i32, i32
  }
  func.func @transform_6(%arg0: i32) -> (i32, i32) {
    %c0_i32 = arith.constant 0 : i32
    %c0_i32_0 = arith.constant 0 : i32
    %c0_i32_1 = arith.constant 0 : i32
    return %c0_i32, %c0_i32_0 : i32, i32
  }
  func.func @transform_7(%arg0: i32) -> (i32, i32) {
    %c0_i32 = arith.constant 0 : i32
    %c0_i32_0 = arith.constant 0 : i32
    %c0_i32_1 = arith.constant 0 : i32
    return %c0_i32, %c0_i32_0 : i32, i32
  }
  func.func @transform_8(%arg0: i32) -> (i32, i32) {
    %c0_i32 = arith.constant 0 : i32
    %c0_i32_0 = arith.constant 0 : i32
    return %arg0, %c0_i32 : i32, i32
  }
}

</mosaic_0001>

<llo_original>
// kernel: vae_forward.1
$region0: #{vae_forward.1}
  #allocation0 [shape = 'u32[]', space=smem, size = 0x4, offset = 0x4, fixed_abs, tag = 'smem constant byte address 0x4 - core index']
  #allocation1 [shape = 'u32[144,128]{1,0:T(1,128)}', space=vmem, size = 0x12000, scoped, tag = 'internal scratch']
  %s0 = inlined_call_operand.vmem [shape: f32[8,32], index: 0, kind: input, shape index: {}]
  %s1 = inlined_call_operand.vmem [shape: f32[8,16], index: 1, kind: input, shape index: {}]
  %s2 = inlined_call_operand.vmem [shape: f32[32,64], index: 2, kind: input, shape index: {}]
  %s3 = inlined_call_operand.vmem [shape: f32[64,32], index: 3, kind: input, shape index: {}]
  %s4 = inlined_call_operand.vmem [shape: f32[32,32], index: 4, kind: input, shape index: {}]
  %s5 = inlined_call_operand.vmem [shape: f32[16,64], index: 5, kind: input, shape index: {}]
  %s6 = inlined_call_operand.vmem [shape: f32[64,32], index: 6, kind: input, shape index: {}]
  %s7 = inlined_call_operand.vmem [shape: f32[8,64], index: 7, kind: input, shape index: {}]
  %s8 = inlined_call_operand.vmem [shape: f32[8,128], index: 8, kind: output, shape index: {}]
  %s9 = sld [smem:[#allocation0]]
  $region42: #{vae_forward.1} parent=0
    _
  %s11 = ssub.s32 1, %s9
  %s12 = scalar_select 0, %s11, %s9
  // Predicated region
  $region2: #{vae_forward.1} parent=0 // pred_check
    _
  $region3: #{vae_forward.1} parent=0 // pred_check_branch
    %14 = sbr.rel (0) target = $region5
  $region4: #{vae_forward.1} parent=0 // pred_region
    _
  $region5: #{vae_forward.1} parent=0 // pred_fallthru
    _
  // Predicated region
  $region6: #{vae_forward.1} parent=0 // pred_check
    _
  $region7: #{vae_forward.1} parent=0 // pred_check_branch
    %16 = sbr.rel (0) target = $region9
  $region8: #{vae_forward.1} parent=0 // pred_region
    _
  $region9: #{vae_forward.1} parent=0 // pred_fallthru
    _
  // Predicated region
  $region10: #{vae_forward.1} parent=0 // pred_check
    _
  $region11: #{vae_forward.1} parent=0 // pred_check_branch
    %18 = sbr.rel (0) target = $region13
  $region12: #{vae_forward.1} parent=0 // pred_region
    _
  $region13: #{vae_forward.1} parent=0 // pred_fallthru
    _
  // Predicated region
  $region14: #{vae_forward.1} parent=0 // pred_check
    _
  $region15: #{vae_forward.1} parent=0 // pred_check_branch
    %20 = sbr.rel (0) target = $region17
  $region16: #{vae_forward.1} parent=0 // pred_region
    _
  $region17: #{vae_forward.1} parent=0 // pred_fallthru
    _
  // Predicated region
  $region18: #{vae_forward.1} parent=0 // pred_check
    _
  $region19: #{vae_forward.1} parent=0 // pred_check_branch
    %22 = sbr.rel (0) target = $region21
  $region20: #{vae_forward.1} parent=0 // pred_region
    _
  $region21: #{vae_forward.1} parent=0 // pred_fallthru
    _
  // Predicated region
  $region22: #{vae_forward.1} parent=0 // pred_check
    _
  $region23: #{vae_forward.1} parent=0 // pred_check_branch
    %24 = sbr.rel (0) target = $region25
  $region24: #{vae_forward.1} parent=0 // pred_region
    _
  $region25: #{vae_forward.1} parent=0 // pred_fallthru
    _
  // Predicated region
  $region26: #{vae_forward.1} parent=0 // pred_check
    _
  $region27: #{vae_forward.1} parent=0 // pred_check_branch
    %26 = sbr.rel (0) target = $region29
  $region28: #{vae_forward.1} parent=0 // pred_region
    _
  $region29: #{vae_forward.1} parent=0 // pred_fallthru
    _
  // Predicated region
  $region30: #{vae_forward.1} parent=0 // pred_check
    _
  $region31: #{vae_forward.1} parent=0 // pred_check_branch
    %28 = sbr.rel (0) target = $region33
  $region32: #{vae_forward.1} parent=0 // pred_region
    _
  $region33: #{vae_forward.1} parent=0 // pred_fallthru
    _
  %v29 = vld [vmem:[%s0] sm:$0xff]
  %v30 = vld [vmem:[%s7] sm:$0xff]
  %v31 = vld [vmem:[%s2] sm:$0xff]
  %v32 = vld [vmem:[%s2 + $0x8] sm:$0xff]
  %v33 = vld [vmem:[%s2 + $0x10] sm:$0xff]
  %v34 = vld [vmem:[%s2 + $0x18] sm:$0xff]
  %v35 = vlaneseq
  %v36 = vshrl.u32 %v35, 7
  %v37 = vsub.s32 0, %v36
  %v38 = vrot.slane %v30, %v37
  %vm39 = vcmask 261120
  %v41 = vsel %vm39, %v29, 0
  %43 = vmatprep.subr.mxu0 0.0
  %44 = vmatpush1.msra.mxu0 %v31
  %45 = vmatprep.subr.mxu0 0.0
  %46 = vmatpush1.msra.mxu0 %v32
  %47 = vmatprep.subr.mxu0 0.0
  %48 = vmatpush1.msra.mxu0 %v33
  %49 = vmatprep.subr.mxu0 0.0
  %50 = vmatpush1.msra.mxu0 %v34
  %51 = vmatprep.subr.mxu0 0.0
  %52 = vmatpush1.msra.mxu0 0.0
  %53 = vmatprep.subr.mxu0 0.0
  %54 = vmatpush1.msra.mxu0 0.0
  %55 = vmatprep.subr.mxu0 0.0
  %56 = vmatpush1.msra.mxu0 0.0
  %57 = vmatprep.subr.mxu0 0.0
  %58 = vmatpush1.msra.mxu0 0.0
  %59 = vmatprep.subr.mxu0 0.0
  %60 = vmatpush1.msra.mxu0 0.0
  %61 = vmatprep.subr.mxu0 0.0
  %62 = vmatpush1.msra.mxu0 0.0
  %63 = vmatprep.subr.mxu0 0.0
  %64 = vmatpush1.msra.mxu0 0.0
  %65 = vmatprep.subr.mxu0 0.0
  %66 = vmatpush1.msra.mxu0 0.0
  %67 = vmatprep.subr.mxu0 0.0
  %68 = vmatpush1.msra.mxu0 0.0
  %69 = vmatprep.subr.mxu0 0.0
  %70 = vmatpush1.msra.mxu0 0.0
  %71 = vmatprep.subr.mxu0 0.0
  %72 = vmatpush1.msra.mxu0 0.0
  %73 = vmatprep.subr.mxu0 0.0
  %74 = vmatpush1.msra.mxu0 0.0
  %75 = vmatprep.subr.mxu0 0.0
  %76 = vmatpush1.msra.mxu0 0.0
  %77 = vmatprep.subr.mxu0 0.0
  %78 = vmatpush1.msra.mxu0 0.0
  %79 = vmatprep.subr.mxu0 0.0
  %80 = vmatpush1.msra.mxu0 0.0
  %81 = vmatprep.subr.mxu0 0.0
  %82 = vmatpush1.msra.mxu0 0.0
  %83 = vmatprep.subr.mxu0 0.0
  %84 = vmatpush1.msra.mxu0 0.0
  %85 = vmatprep.subr.mxu0 0.0
  %86 = vmatpush1.msra.mxu0 0.0
  %87 = vmatprep.subr.mxu0 0.0
  %88 = vmatpush1.msra.mxu0 0.0
  %89 = vmatprep.subr.mxu0 0.0
  %90 = vmatpush1.msra.mxu0 0.0
  %91 = vmatprep.subr.mxu0 0.0
  %92 = vmatpush1.msra.mxu0 0.0
  %93 = vmatprep.subr.mxu0 0.0
  %94 = vmatpush1.msra.mxu0 0.0
  %95 = vmatprep.subr.mxu0 0.0
  %96 = vmatpush1.msra.mxu0 0.0
  %97 = vmatprep.subr.mxu0 0.0
  %98 = vmatpush1.msra.mxu0 0.0
  %99 = vmatprep.subr.mxu0 0.0
  %100 = vmatpush1.msra.mxu0 0.0
  %101 = vmatprep.subr.mxu0 0.0
  %102 = vmatpush1.msra.mxu0 0.0
  %103 = vmatprep.subr.mxu0 0.0
  %104 = vmatpush1.msra.mxu0 0.0
  %105 = vmatprep.subr.mxu0 0.0
  %106 = vmatpush1.msra.mxu0 0.0
  %107 = vmatprep.mubr.f32.mxu0 0.0
  %108 = vmatmul.mubr.f32.gmra.mrb[0].mxu0 %v41
  %v109 = vpop.f32.mrb[0].mxu0
  %v110 = vadd.f32 %v38, %v109
  %v111 = vpop.f32.mrb[0].mxu0
  %112 = vdwg.mxu0
  %v113 = vmax.f32 %v110, 0.0
  %v114 = vld [vmem:[%s3] sm:$0xff]
  %v115 = vld [vmem:[%s3 + $0x8] sm:$0xff]
  %v116 = vld [vmem:[%s3 + $0x10] sm:$0xff]
  %v117 = vld [vmem:[%s3 + $0x18] sm:$0xff]
  %v118 = vld [vmem:[%s3 + $0x20] sm:$0xff]
  %v119 = vld [vmem:[%s3 + $0x28] sm:$0xff]
  %v120 = vld [vmem:[%s3 + $0x30] sm:$0xff]
  %v121 = vld [vmem:[%s3 + $0x38] sm:$0xff]
  %v122 = vlaneseq
  %v123 = vshrl.u32 %v122, 7
  %v124 = vsub.s32 1, %v123
  %v125 = vrot.slane %v30, %v124
  %vm126 = vcmask 523264
  %v128 = vsel %vm126, %v113, 0
  %130 = vmatprep.subr.mxu0 0.0
  %131 = vmatpush1.msra.mxu0 %v114
  %132 = vmatprep.subr.mxu0 0.0
  %133 = vmatpush1.msra.mxu0 %v115
  %134 = vmatprep.subr.mxu0 0.0
  %135 = vmatpush1.msra.mxu0 %v116
  %136 = vmatprep.subr.mxu0 0.0
  %137 = vmatpush1.msra.mxu0 %v117
  %138 = vmatprep.subr.mxu0 0.0
  %139 = vmatpush1.msra.mxu0 %v118
  %140 = vmatprep.subr.mxu0 0.0
  %141 = vmatpush1.msra.mxu0 %v119
  %142 = vmatprep.subr.mxu0 0.0
  %143 = vmatpush1.msra.mxu0 %v120
  %144 = vmatprep.subr.mxu0 0.0
  %145 = vmatpush1.msra.mxu0 %v121
  %146 = vmatprep.subr.mxu0 0.0
  %147 = vmatpush1.msra.mxu0 0.0
  %148 = vmatprep.subr.mxu0 0.0
  %149 = vmatpush1.msra.mxu0 0.0
  %150 = vmatprep.subr.mxu0 0.0
  %151 = vmatpush1.msra.mxu0 0.0
  %152 = vmatprep.subr.mxu0 0.0
  %153 = vmatpush1.msra.mxu0 0.0
  %154 = vmatprep.subr.mxu0 0.0
  %155 = vmatpush1.msra.mxu0 0.0
  %156 = vmatprep.subr.mxu0 0.0
  %157 = vmatpush1.msra.mxu0 0.0
  %158 = vmatprep.subr.mxu0 0.0
  %159 = vmatpush1.msra.mxu0 0.0
  %160 = vmatprep.subr.mxu0 0.0
  %161 = vmatpush1.msra.mxu0 0.0
  %162 = vmatprep.subr.mxu0 0.0
  %163 = vmatpush1.msra.mxu0 0.0
  %164 = vmatprep.subr.mxu0 0.0
  %165 = vmatpush1.msra.mxu0 0.0
  %166 = vmatprep.subr.mxu0 0.0
  %167 = vmatpush1.msra.mxu0 0.0
  %168 = vmatprep.subr.mxu0 0.0
  %169 = vmatpush1.msra.mxu0 0.0
  %170 = vmatprep.subr.mxu0 0.0
  %171 = vmatpush1.msra.mxu0 0.0
  %172 = vmatprep.subr.mxu0 0.0
  %173 = vmatpush1.msra.mxu0 0.0
  %174 = vmatprep.subr.mxu0 0.0
  %175 = vmatpush1.msra.mxu0 0.0
  %176 = vmatprep.subr.mxu0 0.0
  %177 = vmatpush1.msra.mxu0 0.0
  %178 = vmatprep.subr.mxu0 0.0
  %179 = vmatpush1.msra.mxu0 0.0
  %180 = vmatprep.subr.mxu0 0.0
  %181 = vmatpush1.msra.mxu0 0.0
  %182 = vmatprep.subr.mxu0 0.0
  %183 = vmatpush1.msra.mxu0 0.0
  %184 = vmatprep.subr.mxu0 0.0
  %185 = vmatpush1.msra.mxu0 0.0
  %186 = vmatprep.subr.mxu0 0.0
  %187 = vmatpush1.msra.mxu0 0.0
  %188 = vmatprep.subr.mxu0 0.0
  %189 = vmatpush1.msra.mxu0 0.0
  %190 = vmatprep.subr.mxu0 0.0
  %191 = vmatpush1.msra.mxu0 0.0
  %192 = vmatprep.subr.mxu0 0.0
  %193 = vmatpush1.msra.mxu0 0.0
  %194 = vmatprep.mubr.f32.mxu0 0.0
  %195 = vmatmul.mubr.f32.gmra.mrb[0].mxu0 %v128
  %v196 = vpop.f32.mrb[0].mxu0
  %v197 = vadd.f32 %v125, %v196
  %v198 = vpop.f32.mrb[0].mxu0
  %199 = vdwg.mxu0
  %v200 = vmax.f32 %v197, 0.0
  %v201 = vld [vmem:[%s4] sm:$0xff]
  %v202 = vld [vmem:[%s4 + $0x8] sm:$0xff]
  %v203 = vld [vmem:[%s4 + $0x10] sm:$0xff]
  %v204 = vld [vmem:[%s4 + $0x18] sm:$0xff]
  %v205 = vlaneseq
  %v206 = vshrl.u32 %v205, 7
  %v207 = vsub.s32 2, %v206
  %v208 = vrot.slane %v30, %v207
  %v210 = vsel %vm39, %v200, 0
  %212 = vmatprep.subr.mxu0 0.0
  %213 = vmatpush1.msra.mxu0 %v201
  %214 = vmatprep.subr.mxu0 0.0
  %215 = vmatpush1.msra.mxu0 %v202
  %216 = vmatprep.subr.mxu0 0.0
  %217 = vmatpush1.msra.mxu0 %v203
  %218 = vmatprep.subr.mxu0 0.0
  %219 = vmatpush1.msra.mxu0 %v204
  %220 = vmatprep.subr.mxu0 0.0
  %221 = vmatpush1.msra.mxu0 0.0
  %222 = vmatprep.subr.mxu0 0.0
  %223 = vmatpush1.msra.mxu0 0.0
  %224 = vmatprep.subr.mxu0 0.0
  %225 = vmatpush1.msra.mxu0 0.0
  %226 = vmatprep.subr.mxu0 0.0
  %227 = vmatpush1.msra.mxu0 0.0
  %228 = vmatprep.subr.mxu0 0.0
  %229 = vmatpush1.msra.mxu0 0.0
  %230 = vmatprep.subr.mxu0 0.0
  %231 = vmatpush1.msra.mxu0 0.0
  %232 = vmatprep.subr.mxu0 0.0
  %233 = vmatpush1.msra.mxu0 0.0
  %234 = vmatprep.subr.mxu0 0.0
  %235 = vmatpush1.msra.mxu0 0.0
  %236 = vmatprep.subr.mxu0 0.0
  %237 = vmatpush1.msra.mxu0 0.0
  %238 = vmatprep.subr.mxu0 0.0
  %239 = vmatpush1.msra.mxu0 0.0
  %240 = vmatprep.subr.mxu0 0.0
  %241 = vmatpush1.msra.mxu0 0.0
  %242 = vmatprep.subr.mxu0 0.0
  %243 = vmatpush1.msra.mxu0 0.0
  %244 = vmatprep.subr.mxu0 0.0
  %245 = vmatpush1.msra.mxu0 0.0
  %246 = vmatprep.subr.mxu0 0.0
  %247 = vmatpush1.msra.mxu0 0.0
  %248 = vmatprep.subr.mxu0 0.0
  %249 = vmatpush1.msra.mxu0 0.0
  %250 = vmatprep.subr.mxu0 0.0
  %251 = vmatpush1.msra.mxu0 0.0
  %252 = vmatprep.subr.mxu0 0.0
  %253 = vmatpush1.msra.mxu0 0.0
  %254 = vmatprep.subr.mxu0 0.0
  %255 = vmatpush1.msra.mxu0 0.0
  %256 = vmatprep.subr.mxu0 0.0
  %257 = vmatpush1.msra.mxu0 0.0
  %258 = vmatprep.subr.mxu0 0.0
  %259 = vmatpush1.msra.mxu0 0.0
  %260 = vmatprep.subr.mxu0 0.0
  %261 = vmatpush1.msra.mxu0 0.0
  %262 = vmatprep.subr.mxu0 0.0
  %263 = vmatpush1.msra.mxu0 0.0
  %264 = vmatprep.subr.mxu0 0.0
  %265 = vmatpush1.msra.mxu0 0.0
  %266 = vmatprep.subr.mxu0 0.0
  %267 = vmatpush1.msra.mxu0 0.0
  %268 = vmatprep.subr.mxu0 0.0
  %269 = vmatpush1.msra.mxu0 0.0
  %270 = vmatprep.subr.mxu0 0.0
  %271 = vmatpush1.msra.mxu0 0.0
  %272 = vmatprep.subr.mxu0 0.0
  %273 = vmatpush1.msra.mxu0 0.0
  %274 = vmatprep.subr.mxu0 0.0
  %275 = vmatpush1.msra.mxu0 0.0
  %276 = vmatprep.mubr.f32.mxu0 0.0
  %277 = vmatmul.mubr.f32.gmra.mrb[0].mxu0 %v210
  %v278 = vpop.f32.mrb[0].mxu0
  %v279 = vadd.f32 %v208, %v278
  %v280 = vpop.f32.mrb[0].mxu0
  %281 = vdwg.mxu0
  %v282 = vld [vmem:[%s1] sm:$0xff]
  %v283 = vmul.f32 %v279, 0.5
  %v284 = vmul.f32 %v283, 1.442695
  %v285 = vpow.pop %v284
  %287 = vrot.lane.b32.xlu0 %v285, 112
  %v288 = vpop.permute.xlu0 %287
  %v290 = vmul.f32 %v282, %v288
  %v291 = vadd.f32 %v279, %v290
  %v292 = vld [vmem:[%s5] sm:$0xff]
  %v293 = vld [vmem:[%s5 + $0x8] sm:$0xff]
  %v294 = vlaneseq
  %v295 = vshrl.u32 %v294, 7
  %v296 = vsub.s32 3, %v295
  %v297 = vrot.slane %v30, %v296
  %vm298 = vcmask 130048
  %v300 = vsel %vm298, %v291, 0
  %302 = vmatprep.subr.mxu0 0.0
  %303 = vmatpush1.msra.mxu0 %v292
  %304 = vmatprep.subr.mxu0 0.0
  %305 = vmatpush1.msra.mxu0 %v293
  %306 = vmatprep.subr.mxu0 0.0
  %307 = vmatpush1.msra.mxu0 0.0
  %308 = vmatprep.subr.mxu0 0.0
  %309 = vmatpush1.msra.mxu0 0.0
  %310 = vmatprep.subr.mxu0 0.0
  %311 = vmatpush1.msra.mxu0 0.0
  %312 = vmatprep.subr.mxu0 0.0
  %313 = vmatpush1.msra.mxu0 0.0
  %314 = vmatprep.subr.mxu0 0.0
  %315 = vmatpush1.msra.mxu0 0.0
  %316 = vmatprep.subr.mxu0 0.0
  %317 = vmatpush1.msra.mxu0 0.0
  %318 = vmatprep.subr.mxu0 0.0
  %319 = vmatpush1.msra.mxu0 0.0
  %320 = vmatprep.subr.mxu0 0.0
  %321 = vmatpush1.msra.mxu0 0.0
  %322 = vmatprep.subr.mxu0 0.0
  %323 = vmatpush1.msra.mxu0 0.0
  %324 = vmatprep.subr.mxu0 0.0
  %325 = vmatpush1.msra.mxu0 0.0
  %326 = vmatprep.subr.mxu0 0.0
  %327 = vmatpush1.msra.mxu0 0.0
  %328 = vmatprep.subr.mxu0 0.0
  %329 = vmatpush1.msra.mxu0 0.0
  %330 = vmatprep.subr.mxu0 0.0
  %331 = vmatpush1.msra.mxu0 0.0
  %332 = vmatprep.subr.mxu0 0.0
  %333 = vmatpush1.msra.mxu0 0.0
  %334 = vmatprep.subr.mxu0 0.0
  %335 = vmatpush1.msra.mxu0 0.0
  %336 = vmatprep.subr.mxu0 0.0
  %337 = vmatpush1.msra.mxu0 0.0
  %338 = vmatprep.subr.mxu0 0.0
  %339 = vmatpush1.msra.mxu0 0.0
  %340 = vmatprep.subr.mxu0 0.0
  %341 = vmatpush1.msra.mxu0 0.0
  %342 = vmatprep.subr.mxu0 0.0
  %343 = vmatpush1.msra.mxu0 0.0
  %344 = vmatprep.subr.mxu0 0.0
  %345 = vmatpush1.msra.mxu0 0.0
  %346 = vmatprep.subr.mxu0 0.0
  %347 = vmatpush1.msra.mxu0 0.0
  %348 = vmatprep.subr.mxu0 0.0
  %349 = vmatpush1.msra.mxu0 0.0
  %350 = vmatprep.subr.mxu0 0.0
  %351 = vmatpush1.msra.mxu0 0.0
  %352 = vmatprep.subr.mxu0 0.0
  %353 = vmatpush1.msra.mxu0 0.0
  %354 = vmatprep.subr.mxu0 0.0
  %355 = vmatpush1.msra.mxu0 0.0
  %356 = vmatprep.subr.mxu0 0.0
  %357 = vmatpush1.msra.mxu0 0.0
  %358 = vmatprep.subr.mxu0 0.0
  %359 = vmatpush1.msra.mxu0 0.0
  %360 = vmatprep.subr.mxu0 0.0
  %361 = vmatpush1.msra.mxu0 0.0
  %362 = vmatprep.subr.mxu0 0.0
  %363 = vmatpush1.msra.mxu0 0.0
  %364 = vmatprep.subr.mxu0 0.0
  %365 = vmatpush1.msra.mxu0 0.0
  %366 = vmatprep.mubr.f32.mxu0 0.0
  %367 = vmatmul.mubr.f32.gmra.mrb[0].mxu0 %v300
  %v368 = vpop.f32.mrb[0].mxu0
  %v369 = vadd.f32 %v297, %v368
  %v370 = vpop.f32.mrb[0].mxu0
  %371 = vdwg.mxu0
  %v372 = vmax.f32 %v369, 0.0
  %v373 = vld [vmem:[%s6] sm:$0xff]
  %v374 = vld [vmem:[%s6 + $0x8] sm:$0xff]
  %v375 = vld [vmem:[%s6 + $0x10] sm:$0xff]
  %v376 = vld [vmem:[%s6 + $0x18] sm:$0xff]
  %v377 = vld [vmem:[%s6 + $0x20] sm:$0xff]
  %v378 = vld [vmem:[%s6 + $0x28] sm:$0xff]
  %v379 = vld [vmem:[%s6 + $0x30] sm:$0xff]
  %v380 = vld [vmem:[%s6 + $0x38] sm:$0xff]
  %v381 = vlaneseq
  %v382 = vshrl.u32 %v381, 7
  %v383 = vsub.s32 4, %v382
  %v384 = vrot.slane %v30, %v383
  %v386 = vsel %vm126, %v372, 0
  %388 = vmatprep.subr.mxu0 0.0
  %389 = vmatpush1.msra.mxu0 %v373
  %390 = vmatprep.subr.mxu0 0.0
  %391 = vmatpush1.msra.mxu0 %v374
  %392 = vmatprep.subr.mxu0 0.0
  %393 = vmatpush1.msra.mxu0 %v375
  %394 = vmatprep.subr.mxu0 0.0
  %395 = vmatpush1.msra.mxu0 %v376
  %396 = vmatprep.subr.mxu0 0.0
  %397 = vmatpush1.msra.mxu0 %v377
  %398 = vmatprep.subr.mxu0 0.0
  %399 = vmatpush1.msra.mxu0 %v378
  %400 = vmatprep.subr.mxu0 0.0
  %401 = vmatpush1.msra.mxu0 %v379
  %402 = vmatprep.subr.mxu0 0.0
  %403 = vmatpush1.msra.mxu0 %v380
  %404 = vmatprep.subr.mxu0 0.0
  %405 = vmatpush1.msra.mxu0 0.0
  %406 = vmatprep.subr.mxu0 0.0
  %407 = vmatpush1.msra.mxu0 0.0
  %408 = vmatprep.subr.mxu0 0.0
  %409 = vmatpush1.msra.mxu0 0.0
  %410 = vmatprep.subr.mxu0 0.0
  %411 = vmatpush1.msra.mxu0 0.0
  %412 = vmatprep.subr.mxu0 0.0
  %413 = vmatpush1.msra.mxu0 0.0
  %414 = vmatprep.subr.mxu0 0.0
  %415 = vmatpush1.msra.mxu0 0.0
  %416 = vmatprep.subr.mxu0 0.0
  %417 = vmatpush1.msra.mxu0 0.0
  %418 = vmatprep.subr.mxu0 0.0
  %419 = vmatpush1.msra.mxu0 0.0
  %420 = vmatprep.subr.mxu0 0.0
  %421 = vmatpush1.msra.mxu0 0.0
  %422 = vmatprep.subr.mxu0 0.0
  %423 = vmatpush1.msra.mxu0 0.0
  %424 = vmatprep.subr.mxu0 0.0
  %425 = vmatpush1.msra.mxu0 0.0
  %426 = vmatprep.subr.mxu0 0.0
  %427 = vmatpush1.msra.mxu0 0.0
  %428 = vmatprep.subr.mxu0 0.0
  %429 = vmatpush1.msra.mxu0 0.0
  %430 = vmatprep.subr.mxu0 0.0
  %431 = vmatpush1.msra.mxu0 0.0
  %432 = vmatprep.subr.mxu0 0.0
  %433 = vmatpush1.msra.mxu0 0.0
  %434 = vmatprep.subr.mxu0 0.0
  %435 = vmatpush1.msra.mxu0 0.0
  %436 = vmatprep.subr.mxu0 0.0
  %437 = vmatpush1.msra.mxu0 0.0
  %438 = vmatprep.subr.mxu0 0.0
  %439 = vmatpush1.msra.mxu0 0.0
  %440 = vmatprep.subr.mxu0 0.0
  %441 = vmatpush1.msra.mxu0 0.0
  %442 = vmatprep.subr.mxu0 0.0
  %443 = vmatpush1.msra.mxu0 0.0
  %444 = vmatprep.subr.mxu0 0.0
  %445 = vmatpush1.msra.mxu0 0.0
  %446 = vmatprep.subr.mxu0 0.0
  %447 = vmatpush1.msra.mxu0 0.0
  %448 = vmatprep.subr.mxu0 0.0
  %449 = vmatpush1.msra.mxu0 0.0
  %450 = vmatprep.subr.mxu0 0.0
  %451 = vmatpush1.msra.mxu0 0.0
  %452 = vmatprep.mubr.f32.mxu0 0.0
  %453 = vmatmul.mubr.f32.gmra.mrb[0].mxu0 %v386
  %v454 = vpop.f32.mrb[0].mxu0
  %v455 = vadd.f32 %v384, %v454
  %v456 = vpop.f32.mrb[0].mxu0
  %457 = vdwg.mxu0
  %v458 = vtanh.pop %v455
  %460 = vrot.lane.b32.xlu0 %v279, 32
  %v461 = vpop.permute.xlu0 %460
  %v463 = vsel %vm39, %v458, %v461
  %v464 = vsel %vm126, %v463, 0.0
  %465 = vst [vmem:[%s8] sm:$0xff] %v464
  // Predicated region
  $region34: #{vae_forward.1} parent=0 // pred_check
    _
  $region35: #{vae_forward.1} parent=0 // pred_check_branch
    %467 = sbr.rel (0) target = $region37
  $region36: #{vae_forward.1} parent=0 // pred_region
    _
  $region37: #{vae_forward.1} parent=0 // pred_fallthru
    _
  // Predicated region
  $region38: #{vae_forward.1} parent=0 // pred_check
    _
  $region39: #{vae_forward.1} parent=0 // pred_check_branch
    %469 = sbr.rel (0) target = $region41
  $region40: #{vae_forward.1} parent=0 // pred_region
    _
  $region41: #{vae_forward.1} parent=0 // pred_fallthru
    _

</llo_original>
